<compile_context>
chip_gen: v7x
topology: tpu7x:2x2x1
jax: 0.10.0
libtpu: 0.0.40
codegen_flags: <defaults>
</compile_context>

<pallas_src>
import numpy as np
import jax
import jax.numpy as jnp
from jax import lax
from jax.experimental import pallas as pl
from jax.experimental.pallas import tpu as pltpu


def _round_up(x, m):
    return -(-x // m) * m


def make_temporal_block(N, C_in, C_out, L, K, dilation, padding,
                        compute_dtype=jnp.bfloat16, samples_per_step=None,
                        eps=1e-5, vmem_budget_bytes=40 * 1024 * 1024):
    p, d = padding, dilation
    # Standard TCN setting; guarantees conv outputs are >= L and the trim is to L.
    assert p >= d * (K - 1), "kernel assumes padding >= dilation*(K-1)"
    S = L + 2 * p                        # packed per-sample stride (padded length)
    cdt = compute_dtype
    itemsize = jnp.dtype(cdt).itemsize

    # Tap offsets for the fused (conv1 + 1x1 downsample) im2col matmul.  The residual
    # needs the x slice at offset p; when p == d*(K-1) that is exactly the last conv1
    # tap, otherwise an extra tap block is appended.
    offsets = [k * d for k in range(K)]
    fuse_extra = (p != d * (K - 1))
    if fuse_extra:
        offsets = offsets + [p]
    T = len(offsets)
    res_tap = T - 1 if fuse_extra else K - 1

    def est_vmem(nb):
        wg = _round_up(nb * S, 128)
        in_blk = C_in * wg * itemsize
        out_blk = C_out * wg * 4
        wts = (2 * C_out * T * C_in + C_out * K * C_out + wg) * itemsize + 3 * C_out * 4
        work = ((T * C_in + K * C_out + C_out) * wg * itemsize
                + 4 * C_out * wg * 4)
        return 2 * in_blk + 2 * out_blk + wts + 2 * work

    # Lane-fill-first policy (perf review): fill ~128 lanes per grid step; do NOT cap
    # by core count -- the batch grid shrinks instead.  Cap by N and the VMEM budget.
    if samples_per_step is None:
        nb_lane = max(1, 128 // S) if S <= 128 else 1
        samples_per_step = max(1, min(nb_lane, N))
        while samples_per_step > 1 and est_vmem(samples_per_step) > vmem_budget_bytes:
            samples_per_step -= 1
    NB = samples_per_step                # samples per grid step
    G = -(-N // NB)                      # grid steps (sample groups)
    Wg = _round_up(NB * S, 128)          # lane-dense packed width per group
    Wc = Wg - p                          # computed output width per group
    needs_mask = (NB > 1 and p > 0)      # inter-sample margin mask required

    if needs_mask:
        cols = np.arange(Wg)
        margin_mask = jnp.asarray(((cols % S) >= p).astype(np.float32),
                                  dtype=cdt)[None, :]            # (1, Wg)

    def kernel(*refs):
        if needs_mask:
            x_ref, wf_ref, sa_ref, w2_ref, sb_ref, mask_ref, o_ref = refs
        else:
            x_ref, wf_ref, sa_ref, w2_ref, sb_ref, o_ref = refs

        x = x_ref[0]                                             # (C_in, Wg) cdt

        # ---- fused conv1 + 1x1 residual: single im2col matmul, f32 accumulation ----
        xcol = jnp.concatenate(
            [x[:, o:o + Wc] for o in offsets], axis=0)           # (T*C_in, Wc)
        fused = jnp.dot(wf_ref[...], xcol,
                        preferred_element_type=jnp.float32) + sa_ref[...]  # (2C_out, Wc)
        # rows [0, C_out): conv1 (+BN1 shift) -> ReLU;  rows [C_out, 2C_out): res (+bd)
        h = jnp.maximum(fused[:C_out], 0.0).astype(cdt)          # (C_out, Wc) cdt
        res = fused[C_out:]                                      # (C_out, Wc) f32

        # ---- conv2 input: left zero-pad by p (register concat); inter-sample
        #      margins zeroed with a precomputed mask (no iota/mod in-kernel).
        if p:
            h_ext = jnp.concatenate(
                [jnp.zeros((C_out, p), cdt), h], axis=1)         # (C_out, Wg)
        else:
            h_ext = h
        if needs_mask:
            h_ext = h_ext * mask_ref[...]

        # ---- conv2 (dilated): single im2col matmul ----
        hcol = jnp.concatenate(
            [h_ext[:, k * d:k * d + Wc] for k in range(K)], axis=0)  # (K*C_out, Wc)
        out = jnp.dot(w2_ref[...], hcol,
                      preferred_element_type=jnp.float32) + sb_ref[...]
        out = jnp.maximum(out, 0.0)                              # BN2 shift + ReLU
        out = jnp.maximum(out + res, 0.0)                        # residual + final ReLU
        # Direct partial store; the [Wc, Wg) tail is never read by unpack_output.
        o_ref[0, :, :Wc] = out

    in_specs = [
        pl.BlockSpec((1, C_in, Wg), lambda g: (g, 0, 0)),
        pl.BlockSpec((2 * C_out, T * C_in), lambda g: (0, 0)),
        pl.BlockSpec((2 * C_out, 1), lambda g: (0, 0)),
        pl.BlockSpec((C_out, K * C_out), lambda g: (0, 0)),
        pl.BlockSpec((C_out, 1), lambda g: (0, 0)),
    ]
    if needs_mask:
        in_specs.append(pl.BlockSpec((1, Wg), lambda g: (0, 0)))

    call = pl.pallas_call(
        kernel,
        out_shape=jax.ShapeDtypeStruct((G, C_out, Wg), jnp.float32),
        grid_spec=pltpu.PrefetchScalarGridSpec(
            num_scalar_prefetch=0,
            grid=(G,),
            in_specs=in_specs,
            out_specs=pl.BlockSpec((1, C_out, Wg), lambda g: (g, 0, 0)),
        ),
        compiler_params=pltpu.CompilerParams(
            dimension_semantics=("parallel",),
            # Derived from the actual block sizes with 2x headroom, clamped so it is
            # safe on v5e/v6e (128 MiB physical) and v7x (64 MiB physical).
            vmem_limit_bytes=int(min(max(2 * est_vmem(NB), 32 * 1024 * 1024),
                                     60 * 1024 * 1024)),
        ),
    )

    def pack_input(x):
        # (N, C_in, L) -> (G, C_in, Wg): zero-pad each sample by p on both sides and
        # pack NB samples side by side on the lane axis at stride S (zeros elsewhere).
        n_pad = G * NB - N
        if n_pad:
            x = jnp.concatenate([x, jnp.zeros((n_pad, C_in, L), x.dtype)], axis=0)
        xp = jnp.pad(x, ((0, 0), (0, 0), (p, p)))                # (G*NB, C_in, S)
        xp = xp.reshape(G, NB, C_in, S).transpose(0, 2, 1, 3).reshape(G, C_in, NB * S)
        if Wg > NB * S:
            xp = jnp.pad(xp, ((0, 0), (0, 0), (0, Wg - NB * S)))
        return xp.astype(cdt)

    def unpack_output(o_packed):
        # (G, C_out, Wg) -> (N, C_out, L): sample j of group g lives at lanes
        # [j*S, j*S + L) of that group's output slab; everything else is discarded.
        o = o_packed[:, :, :NB * S].reshape(G, C_out, NB, S)[..., :L]
        return o.transpose(0, 2, 1, 3).reshape(G * NB, C_out, L)[:N]

    @jax.jit
    def fwd(x, w1, b1, g1, be1, m1, v1, w2, b2, g2, be2, m2, v2, wd, bd):
        # ---- host-side parameter folding (eval-mode BN) ----
        #   BN(conv(x) + b) = a*conv(x) + s  with  a = g/sqrt(v+eps), s = beta - m*a + a*b
        a1 = g1 / jnp.sqrt(v1 + eps)
        s1 = be1 - m1 * a1 + a1 * b1
        a2 = g2 / jnp.sqrt(v2 + eps)
        s2 = be2 - m2 * a2 + a2 * b2
        # Fused conv1 + downsample weight, tap-major to match the in-kernel im2col.
        w1_taps = jnp.transpose(a1[:, None, None] * w1, (0, 2, 1))   # (C_out, K, C_in)
        if fuse_extra:
            w1_taps = jnp.concatenate(
                [w1_taps, jnp.zeros((C_out, 1, C_in), w1_taps.dtype)], axis=1)
        wd_taps = jnp.zeros((C_out, T, C_in), wd.dtype).at[:, res_tap, :].set(wd)
        w_fused = jnp.concatenate([w1_taps, wd_taps], axis=0).reshape(
            2 * C_out, T * C_in).astype(cdt)
        shift_a = jnp.concatenate([s1, bd])[:, None]                 # (2*C_out, 1) f32
        w2f = jnp.transpose(a2[:, None, None] * w2, (0, 2, 1)).reshape(
            C_out, K * C_out).astype(cdt)
        shift_b = s2[:, None]                                        # (C_out, 1) f32

        args = [pack_input(x), w_fused, shift_a, w2f, shift_b]
        if needs_mask:
            args.append(margin_mask)
        return unpack_output(call(*args))

    return fwd


# ----------------------------- references --------------------------------------
def conv1d_ref(x, w, padding, dilation):
    return lax.conv_general_dilated(
        x, w, window_strides=(1,), padding=[(padding, padding)],
        rhs_dilation=(dilation,), dimension_numbers=("NCH", "OIH", "NCH"),
        precision=lax.Precision.HIGHEST)


def temporal_block_ref(x, params, padding, dilation, eps):
    """Pure-JAX f32 reference of the PyTorch TemporalBlock.forward (eval mode)."""
    w1, b1, g1, be1, m1, v1, w2, b2, g2, be2, m2, v2, wd, bd = params
    h = conv1d_ref(x, w1, padding, dilation) + b1[None, :, None]
    h = (g1[None, :, None] * (h - m1[None, :, None])
         / jnp.sqrt(v1 + eps)[None, :, None] + be1[None, :, None])
    h = jnp.maximum(h, 0.0)
    o = conv1d_ref(h, w2, padding, dilation) + b2[None, :, None]
    o = (g2[None, :, None] * (o - m2[None, :, None])
         / jnp.sqrt(v2 + eps)[None, :, None] + be2[None, :, None])
    o = jnp.maximum(o, 0.0)
    r = jnp.einsum("oc,ncl->nol", wd, x,
                   precision=lax.Precision.HIGHEST) + bd[None, :, None]
    min_len = min(o.shape[2], r.shape[2])
    return jnp.maximum(o[:, :, :min_len] + r[:, :, :min_len], 0.0)


def temporal_block_ref_folded(x, params, padding, dilation, eps, compute_dtype):
    """Same forward, but with BN scales folded into the conv weights and matmul
    operands rounded to `compute_dtype` exactly as the kernel does (f32 accumulate),
    so the comparison isolates kernel correctness from bf16 quantization."""
    w1, b1, g1, be1, m1, v1, w2, b2, g2, be2, m2, v2, wd, bd = params
    rnd = lambda t: t.astype(compute_dtype).astype(jnp.float32)
    a1 = g1 / jnp.sqrt(v1 + eps)
    s1 = be1 - m1 * a1 + a1 * b1
    a2 = g2 / jnp.sqrt(v2 + eps)
    s2 = be2 - m2 * a2 + a2 * b2
    xc = rnd(x)
    h = conv1d_ref(xc, rnd(a1[:, None, None] * w1), padding, dilation) + s1[None, :, None]
    h = jnp.maximum(h, 0.0)
    o = conv1d_ref(rnd(h), rnd(a2[:, None, None] * w2), padding, dilation) + s2[None, :, None]
    o = jnp.maximum(o, 0.0)
    r = jnp.einsum("oc,ncl->nol", rnd(wd), xc,
                   precision=lax.Precision.HIGHEST) + bd[None, :, None]
    min_len = min(o.shape[2], r.shape[2])
    return jnp.maximum(o[:, :, :min_len] + r[:, :, :min_len], 0.0)


def _make_params(key, C_in, C_out, K):
    ks = jax.random.split(key, 15)
    w1 = jax.random.normal(ks[0], (C_out, C_in, K), jnp.float32) * 0.2
    b1 = jax.random.normal(ks[1], (C_out,), jnp.float32) * 0.1
    w2 = jax.random.normal(ks[2], (C_out, C_out, K), jnp.float32) * 0.2
    b2 = jax.random.normal(ks[3], (C_out,), jnp.float32) * 0.1
    wd = jax.random.normal(ks[4], (C_out, C_in), jnp.float32) * 0.2
    bd = jax.random.normal(ks[5], (C_out,), jnp.float32) * 0.1
    g1 = 1.0 + 0.1 * jax.random.normal(ks[6], (C_out,), jnp.float32)
    be1 = 0.1 * jax.random.normal(ks[7], (C_out,), jnp.float32)
    m1 = 0.1 * jax.random.normal(ks[8], (C_out,), jnp.float32)
    v1 = jax.random.uniform(ks[9], (C_out,), jnp.float32, 0.5, 1.5)
    g2 = 1.0 + 0.1 * jax.random.normal(ks[10], (C_out,), jnp.float32)
    be2 = 0.1 * jax.random.normal(ks[11], (C_out,), jnp.float32)
    m2 = 0.1 * jax.random.normal(ks[12], (C_out,), jnp.float32)
    v2 = jax.random.uniform(ks[13], (C_out,), jnp.float32, 0.5, 1.5)
    return (w1, b1, g1, be1, m1, v1, w2, b2, g2, be2, m2, v2, wd, bd)


if __name__ == "__main__":
    # Small config consistent with the module's constructor signature.
    N, C_in, C_out, L = 2, 4, 8, 16
    K, stride, dilation, dropout = 3, 1, 2, 0.2
    padding = (K - 1) * dilation        # 4 (typical TCN setting)
    eps = 1e-5

    key = jax.random.PRNGKey(0)
    kx, kx3, kp = jax.random.split(key, 3)
    x = jax.random.normal(kx, (N, C_in, L), jnp.float32)
    params = _make_params(kp, C_in, C_out, K)
    ref_f32 = temporal_block_ref(x, params, padding, dilation, eps)

    # A) f32 MXU-operand mode, auto packing (NB=2 here -> multi-sample margin path
    #    is exercised): must match the exact PyTorch eval-mode semantics.
    fwd_f32 = make_temporal_block(N, C_in, C_out, L, K, dilation, padding,
                                  compute_dtype=jnp.float32, eps=eps)
    y_f32 = jax.block_until_ready(fwd_f32(x, *params))
    assert y_f32.shape == (N, C_out, L), y_f32.shape
    np.testing.assert_allclose(np.asarray(y_f32), np.asarray(ref_f32),
                               rtol=1e-4, atol=1e-4)

    # B) bf16 MXU-operand mode (performance configuration): compare against the
    #    reference evaluated with identically bf16-rounded operands (tight), plus a
    #    loose sanity check against the f32 module output.
    fwd_bf16 = make_temporal_block(N, C_in, C_out, L, K, dilation, padding,
                                   compute_dtype=jnp.bfloat16, eps=eps)
    y_bf16 = jax.block_until_ready(fwd_bf16(x, *params))
    ref_bf16 = temporal_block_ref_folded(x, params, padding, dilation, eps, jnp.bfloat16)
    np.testing.assert_allclose(np.asarray(y_bf16), np.asarray(ref_bf16),
                               rtol=2e-3, atol=2e-3)
    np.testing.assert_allclose(np.asarray(y_bf16), np.asarray(ref_f32),
                               rtol=0.1, atol=0.1)

    # C) N not a multiple of samples_per_step (explicit NB=2, N=3, 2 grid steps,
    #    padded last group): exercises packing + batch-padding edge cases.
    x3 = jax.random.normal(kx3, (3, C_in, L), jnp.float32)
    fwd_n3 = make_temporal_block(3, C_in, C_out, L, K, dilation, padding,
                                 compute_dtype=jnp.float32, samples_per_step=2, eps=eps)
    y_n3 = jax.block_until_ready(fwd_n3(x3, *params))
    ref_n3 = temporal_block_ref(x3, params, padding, dilation, eps)
    np.testing.assert_allclose(np.asarray(y_n3), np.asarray(ref_n3),
                               rtol=1e-4, atol=1e-4)

    # D) padding > dilation*(K-1): exercises the extra-tap residual fusion path.
    pad_big = padding + 2
    fwd_pb = make_temporal_block(N, C_in, C_out, L, K, dilation, pad_big,
                                 compute_dtype=jnp.float32, eps=eps)
    y_pb = jax.block_until_ready(fwd_pb(x, *params))
    ref_pb = temporal_block_ref(x, params, pad_big, dilation, eps)
    np.testing.assert_allclose(np.asarray(y_pb), np.asarray(ref_pb),
                               rtol=1e-4, atol=1e-4)

    # E) single sample per slab (no margin-mask operand branch).
    fwd_s1 = make_temporal_block(N, C_in, C_out, L, K, dilation, padding,
                                 compute_dtype=jnp.float32, samples_per_step=1, eps=eps)
    y_s1 = jax.block_until_ready(fwd_s1(x, *params))
    np.testing.assert_allclose(np.asarray(y_s1), np.asarray(ref_f32),
                               rtol=1e-4, atol=1e-4)

    print("KERNEL_OK")
</pallas_src>

<mosaic_0001>
module attributes {stable_mosaic.version = 11 : i64} {
  func.func @kernel(%arg0: i32, %arg1: memref<1x4x128xf32, #tpu.memory_space<vmem>>, %arg2: memref<16x12xf32, #tpu.memory_space<vmem>>, %arg3: memref<16x1xf32, #tpu.memory_space<vmem>>, %arg4: memref<8x24xf32, #tpu.memory_space<vmem>>, %arg5: memref<8x1xf32, #tpu.memory_space<vmem>>, %arg6: memref<1x128xf32, #tpu.memory_space<vmem>>, %arg7: memref<1x8x128xf32, #tpu.memory_space<vmem>>) attributes {dimension_semantics = [#tpu.dimension_semantics<parallel>], iteration_bounds = array<i64: 1>, scalar_prefetch = 0 : i64, scratch_operands = 0 : i64, tpu.core_type = #tpu.core_type<tc>, window_params = [{transform_indices = @transform_0, window_bounds = array<i64: 1, 4, 128>}, {pipeline_mode = #tpu.pipeline_mode<synchronous>, transform_indices = @transform_1, window_bounds = array<i64: 16, 12>}, {pipeline_mode = #tpu.pipeline_mode<synchronous>, transform_indices = @transform_2, window_bounds = array<i64: 16, 1>}, {pipeline_mode = #tpu.pipeline_mode<synchronous>, transform_indices = @transform_3, window_bounds = array<i64: 8, 24>}, {pipeline_mode = #tpu.pipeline_mode<synchronous>, transform_indices = @transform_4, window_bounds = array<i64: 8, 1>}, {pipeline_mode = #tpu.pipeline_mode<synchronous>, transform_indices = @transform_5, window_bounds = array<i64: 1, 128>}, {transform_indices = @transform_6, window_bounds = array<i64: 1, 8, 128>}]} {
    %c0 = arith.constant 0 : index
    %c0_0 = arith.constant 0 : index
    %c0_1 = arith.constant 0 : index
    %0 = vector.load %arg1[%c0, %c0_0, %c0_1] : memref<1x4x128xf32, #tpu.memory_space<vmem>>, vector<1x4x128xf32>
    %1 = vector.shape_cast %0 : vector<1x4x128xf32> to vector<4x128xf32>
    %2 = vector.extract_strided_slice %1 {offsets = [0, 0], sizes = [4, 124], strides = [1, 1]} : vector<4x128xf32> to vector<4x124xf32>
    %3 = vector.extract_strided_slice %1 {offsets = [0, 2], sizes = [4, 124], strides = [1, 1]} : vector<4x128xf32> to vector<4x124xf32>
    %4 = vector.extract_strided_slice %1 {offsets = [0, 4], sizes = [4, 124], strides = [1, 1]} : vector<4x128xf32> to vector<4x124xf32>
    %5 = tpu.concatenate %2, %3, %4 in 0 : vector<4x124xf32>, vector<4x124xf32>, vector<4x124xf32> -> vector<12x124xf32>
    %c0_2 = arith.constant 0 : index
    %c0_3 = arith.constant 0 : index
    %6 = vector.load %arg2[%c0_2, %c0_3] : memref<16x12xf32, #tpu.memory_space<vmem>>, vector<16x12xf32>
    %cst = arith.constant dense<0.000000e+00> : vector<16x124xf32>
    %7 = tpu.matmul %6, %5, %cst {dimension_numbers = #tpu.dot_dimension_numbers<[1], [0], [0], [1], [0, 0, 1, 1], [], []>} : vector<16x12xf32>, vector<12x124xf32>, vector<16x124xf32> -> vector<16x124xf32>
    %c0_4 = arith.constant 0 : index
    %c0_5 = arith.constant 0 : index
    %8 = vector.load %arg3[%c0_4, %c0_5] : memref<16x1xf32, #tpu.memory_space<vmem>>, vector<16x1xf32>
    %9 = vector.broadcast %8 : vector<16x1xf32> to vector<16x124xf32>
    %10 = arith.addf %7, %9 : vector<16x124xf32>
    %11 = vector.extract_strided_slice %10 {offsets = [0, 0], sizes = [8, 124], strides = [1, 1]} : vector<16x124xf32> to vector<8x124xf32>
    %cst_6 = arith.constant 0.000000e+00 : f32
    %12 = vector.broadcast %cst_6 : f32 to vector<8x124xf32>
    %13 = arith.maximumf %11, %12 : vector<8x124xf32>
    %14 = vector.extract_strided_slice %10 {offsets = [8, 0], sizes = [8, 124], strides = [1, 1]} : vector<16x124xf32> to vector<8x124xf32>
    %cst_7 = arith.constant 0.000000e+00 : f32
    %15 = vector.broadcast %cst_7 : f32 to vector<8x4xf32>
    %16 = tpu.concatenate %15, %13 in 1 : vector<8x4xf32>, vector<8x124xf32> -> vector<8x128xf32>
    %c0_8 = arith.constant 0 : index
    %c0_9 = arith.constant 0 : index
    %17 = vector.load %arg6[%c0_8, %c0_9] : memref<1x128xf32, #tpu.memory_space<vmem>>, vector<1x128xf32>
    %18 = vector.broadcast %17 : vector<1x128xf32> to vector<8x128xf32>
    %19 = arith.mulf %16, %18 : vector<8x128xf32>
    %20 = vector.extract_strided_slice %19 {offsets = [0, 0], sizes = [8, 124], strides = [1, 1]} : vector<8x128xf32> to vector<8x124xf32>
    %21 = vector.extract_strided_slice %19 {offsets = [0, 2], sizes = [8, 124], strides = [1, 1]} : vector<8x128xf32> to vector<8x124xf32>
    %22 = vector.extract_strided_slice %19 {offsets = [0, 4], sizes = [8, 124], strides = [1, 1]} : vector<8x128xf32> to vector<8x124xf32>
    %23 = tpu.concatenate %20, %21, %22 in 0 : vector<8x124xf32>, vector<8x124xf32>, vector<8x124xf32> -> vector<24x124xf32>
    %c0_10 = arith.constant 0 : index
    %c0_11 = arith.constant 0 : index
    %24 = vector.load %arg4[%c0_10, %c0_11] : memref<8x24xf32, #tpu.memory_space<vmem>>, vector<8x24xf32>
    %cst_12 = arith.constant dense<0.000000e+00> : vector<8x124xf32>
    %25 = tpu.matmul %24, %23, %cst_12 {dimension_numbers = #tpu.dot_dimension_numbers<[1], [0], [0], [1], [0, 0, 1, 1], [], []>} : vector<8x24xf32>, vector<24x124xf32>, vector<8x124xf32> -> vector<8x124xf32>
    %c0_13 = arith.constant 0 : index
    %c0_14 = arith.constant 0 : index
    %26 = vector.load %arg5[%c0_13, %c0_14] : memref<8x1xf32, #tpu.memory_space<vmem>>, vector<8x1xf32>
    %27 = vector.broadcast %26 : vector<8x1xf32> to vector<8x124xf32>
    %28 = arith.addf %25, %27 : vector<8x124xf32>
    %cst_15 = arith.constant 0.000000e+00 : f32
    %29 = vector.broadcast %cst_15 : f32 to vector<8x124xf32>
    %30 = arith.maximumf %28, %29 : vector<8x124xf32>
    %31 = arith.addf %30, %14 : vector<8x124xf32>
    %cst_16 = arith.constant 0.000000e+00 : f32
    %32 = vector.broadcast %cst_16 : f32 to vector<8x124xf32>
    %33 = arith.maximumf %31, %32 : vector<8x124xf32>
    %c0_17 = arith.constant 0 : index
    %c0_18 = arith.constant 0 : index
    %c0_19 = arith.constant 0 : index
    %34 = vector.load %arg7[%c0_17, %c0_18, %c0_19] : memref<1x8x128xf32, #tpu.memory_space<vmem>>, vector<1x8x124xf32>
    %35 = vector.shape_cast %34 : vector<1x8x124xf32> to vector<8x124xf32>
    %36 = vector.shape_cast %33 : vector<8x124xf32> to vector<1x8x124xf32>
    tpu.vector_store %arg7[%c0_17, %c0_18, %c0_19], %36 {strides = array<i32>} : memref<1x8x128xf32, #tpu.memory_space<vmem>>, vector<1x8x124xf32>,
    return
  }
  func.func @transform_0(%arg0: i32) -> (i32, i32, i32) {
    %c0_i32 = arith.constant 0 : i32
    %c0_i32_0 = arith.constant 0 : i32
    %c0_i32_1 = arith.constant 0 : i32
    return %arg0, %c0_i32, %c0_i32_0 : i32, i32, i32
  }
  func.func @transform_1(%arg0: i32) -> (i32, i32) {
    %c0_i32 = arith.constant 0 : i32
    %c0_i32_0 = arith.constant 0 : i32
    %c0_i32_1 = arith.constant 0 : i32
    return %c0_i32, %c0_i32_0 : i32, i32
  }
  func.func @transform_2(%arg0: i32) -> (i32, i32) {
    %c0_i32 = arith.constant 0 : i32
    %c0_i32_0 = arith.constant 0 : i32
    %c0_i32_1 = arith.constant 0 : i32
    return %c0_i32, %c0_i32_0 : i32, i32
  }
  func.func @transform_3(%arg0: i32) -> (i32, i32) {
    %c0_i32 = arith.constant 0 : i32
    %c0_i32_0 = arith.constant 0 : i32
    %c0_i32_1 = arith.constant 0 : i32
    return %c0_i32, %c0_i32_0 : i32, i32
  }
  func.func @transform_4(%arg0: i32) -> (i32, i32) {
    %c0_i32 = arith.constant 0 : i32
    %c0_i32_0 = arith.constant 0 : i32
    %c0_i32_1 = arith.constant 0 : i32
    return %c0_i32, %c0_i32_0 : i32, i32
  }
  func.func @transform_5(%arg0: i32) -> (i32, i32) {
    %c0_i32 = arith.constant 0 : i32
    %c0_i32_0 = arith.constant 0 : i32
    %c0_i32_1 = arith.constant 0 : i32
    return %c0_i32, %c0_i32_0 : i32, i32
  }
  func.func @transform_6(%arg0: i32) -> (i32, i32, i32) {
    %c0_i32 = arith.constant 0 : i32
    %c0_i32_0 = arith.constant 0 : i32
    %c0_i32_1 = arith.constant 0 : i32
    return %arg0, %c0_i32, %c0_i32_0 : i32, i32, i32
  }
}

</mosaic_0001>

<llo_original>
// kernel: fwd.1
$region0: #{fwd.1}
  #allocation0 [shape = 'u32[]', space=smem, size = 0x4, offset = 0x4, fixed_abs, tag = 'smem constant byte address 0x4 - core index']
  #allocation1 [shape = 'u32[144,128]{1,0:T(1,128)}', space=vmem, size = 0x12000, scoped, tag = 'internal scratch']
  %s0 = inlined_call_operand.vmem [shape: f32[1,4,128], index: 0, kind: input, shape index: {}]
  %s1 = inlined_call_operand.vmem [shape: f32[16,12], index: 1, kind: input, shape index: {}]
  %s2 = inlined_call_operand.vmem [shape: f32[16,1], index: 2, kind: input, shape index: {}]
  %s3 = inlined_call_operand.vmem [shape: f32[8,24], index: 3, kind: input, shape index: {}]
  %s4 = inlined_call_operand.vmem [shape: f32[8,1], index: 4, kind: input, shape index: {}]
  %s5 = inlined_call_operand.vmem [shape: f32[1,128], index: 5, kind: input, shape index: {}]
  %s6 = inlined_call_operand.vmem [shape: f32[1,8,128], index: 6, kind: output, shape index: {}]
  %s7 = sld [smem:[#allocation0]]
  $region34: #{fwd.1} parent=0
    _
  %s9 = ssub.s32 1, %s7
  %s10 = scalar_select 0, %s9, %s7
  // Predicated region
  $region2: #{fwd.1} parent=0 // pred_check
    _
  $region3: #{fwd.1} parent=0 // pred_check_branch
    %12 = sbr.rel (0) target = $region5
  $region4: #{fwd.1} parent=0 // pred_region
    _
  $region5: #{fwd.1} parent=0 // pred_fallthru
    _
  // Predicated region
  $region6: #{fwd.1} parent=0 // pred_check
    _
  $region7: #{fwd.1} parent=0 // pred_check_branch
    %14 = sbr.rel (0) target = $region9
  $region8: #{fwd.1} parent=0 // pred_region
    _
  $region9: #{fwd.1} parent=0 // pred_fallthru
    _
  // Predicated region
  $region10: #{fwd.1} parent=0 // pred_check
    _
  $region11: #{fwd.1} parent=0 // pred_check_branch
    %16 = sbr.rel (0) target = $region13
  $region12: #{fwd.1} parent=0 // pred_region
    _
  $region13: #{fwd.1} parent=0 // pred_fallthru
    _
  // Predicated region
  $region14: #{fwd.1} parent=0 // pred_check
    _
  $region15: #{fwd.1} parent=0 // pred_check_branch
    %18 = sbr.rel (0) target = $region17
  $region16: #{fwd.1} parent=0 // pred_region
    _
  $region17: #{fwd.1} parent=0 // pred_fallthru
    _
  // Predicated region
  $region18: #{fwd.1} parent=0 // pred_check
    _
  $region19: #{fwd.1} parent=0 // pred_check_branch
    %20 = sbr.rel (0) target = $region21
  $region20: #{fwd.1} parent=0 // pred_region
    _
  $region21: #{fwd.1} parent=0 // pred_fallthru
    _
  // Predicated region
  $region22: #{fwd.1} parent=0 // pred_check
    _
  $region23: #{fwd.1} parent=0 // pred_check_branch
    %22 = sbr.rel (0) target = $region25
  $region24: #{fwd.1} parent=0 // pred_region
    _
  $region25: #{fwd.1} parent=0 // pred_fallthru
    _
  %v23 = vld [vmem:[%s0] sm:$0xf]
  %v25 = vrot.slane %v23, 4
  %26 = vrot.lane.b32.xlu0 %v25, 126
  %v27 = vpop.permute.xlu0 %26
  %29 = vrot.lane.b32.xlu0 %v23, 124
  %v30 = vpop.permute.xlu0 %29
  %vm31 = vcmask 1043456
  %v32 = vsel %vm31, %v23, %v27
  %v33 = vld [vmem:[%s1] sm:$0xff]
  %v34 = vld [vmem:[%s1 + $0x8] sm:$0xff]
  %v35 = vld [vmem:[%s2] sm:$0xff]
  %v36 = vld [vmem:[%s2 + $0x8] sm:$0xff]
  %38 = vset.pattern.permute.xlu0 0
  %39 = vperm.xlu0 %38, %v35
  %v40 = vpop.permute.xlu0 %39
  %43 = vset.pattern.permute.xlu0 0
  %44 = vperm.xlu0 %43, %v36
  %v45 = vpop.permute.xlu0 %44
  %vm47 = vcmask 97280
  %v49 = vsel %vm47, %v33, 0
  %v52 = vsel %vm47, %v34, 0
  %v54 = vsel %vm31, %v30, 0
  %56 = vmatprep.subr.mxu0 0.0
  %57 = vmatpush1.msra.mxu0 %v32
  %58 = vmatprep.subr.mxu0 0.0
  %59 = vmatpush1.msra.mxu0 %v54
  %60 = vmatprep.subr.mxu0 0.0
  %61 = vmatpush1.msra.mxu0 0.0
  %62 = vmatprep.subr.mxu0 0.0
  %63 = vmatpush1.msra.mxu0 0.0
  %64 = vmatprep.subr.mxu0 0.0
  %65 = vmatpush1.msra.mxu0 0.0
  %66 = vmatprep.subr.mxu0 0.0
  %67 = vmatpush1.msra.mxu0 0.0
  %68 = vmatprep.subr.mxu0 0.0
  %69 = vmatpush1.msra.mxu0 0.0
  %70 = vmatprep.subr.mxu0 0.0
  %71 = vmatpush1.msra.mxu0 0.0
  %72 = vmatprep.subr.mxu0 0.0
  %73 = vmatpush1.msra.mxu0 0.0
  %74 = vmatprep.subr.mxu0 0.0
  %75 = vmatpush1.msra.mxu0 0.0
  %76 = vmatprep.subr.mxu0 0.0
  %77 = vmatpush1.msra.mxu0 0.0
  %78 = vmatprep.subr.mxu0 0.0
  %79 = vmatpush1.msra.mxu0 0.0
  %80 = vmatprep.subr.mxu0 0.0
  %81 = vmatpush1.msra.mxu0 0.0
  %82 = vmatprep.subr.mxu0 0.0
  %83 = vmatpush1.msra.mxu0 0.0
  %84 = vmatprep.subr.mxu0 0.0
  %85 = vmatpush1.msra.mxu0 0.0
  %86 = vmatprep.subr.mxu0 0.0
  %87 = vmatpush1.msra.mxu0 0.0
  %88 = vmatprep.subr.mxu0 0.0
  %89 = vmatpush1.msra.mxu0 0.0
  %90 = vmatprep.subr.mxu0 0.0
  %91 = vmatpush1.msra.mxu0 0.0
  %92 = vmatprep.subr.mxu0 0.0
  %93 = vmatpush1.msra.mxu0 0.0
  %94 = vmatprep.subr.mxu0 0.0
  %95 = vmatpush1.msra.mxu0 0.0
  %96 = vmatprep.subr.mxu0 0.0
  %97 = vmatpush1.msra.mxu0 0.0
  %98 = vmatprep.subr.mxu0 0.0
  %99 = vmatpush1.msra.mxu0 0.0
  %100 = vmatprep.subr.mxu0 0.0
  %101 = vmatpush1.msra.mxu0 0.0
  %102 = vmatprep.subr.mxu0 0.0
  %103 = vmatpush1.msra.mxu0 0.0
  %104 = vmatprep.subr.mxu0 0.0
  %105 = vmatpush1.msra.mxu0 0.0
  %106 = vmatprep.subr.mxu0 0.0
  %107 = vmatpush1.msra.mxu0 0.0
  %108 = vmatprep.subr.mxu0 0.0
  %109 = vmatpush1.msra.mxu0 0.0
  %110 = vmatprep.subr.mxu0 0.0
  %111 = vmatpush1.msra.mxu0 0.0
  %112 = vmatprep.subr.mxu0 0.0
  %113 = vmatpush1.msra.mxu0 0.0
  %114 = vmatprep.subr.mxu0 0.0
  %115 = vmatpush1.msra.mxu0 0.0
  %116 = vmatprep.subr.mxu0 0.0
  %117 = vmatpush1.msra.mxu0 0.0
  %118 = vmatprep.subr.mxu0 0.0
  %119 = vmatpush1.msra.mxu0 0.0
  %120 = vmatprep.mubr.f32.mxu0 0.0
  %121 = vmatmul.mubr.f32.gmra.mrb[0].mxu0 %v49
  %v122 = vpop.f32.mrb[0].mxu0
  %v123 = vadd.f32 %v40, %v122
  %v124 = vpop.f32.mrb[0].mxu0
  %125 = vmatprep.mubr.f32.mxu0 0.0
  %126 = vmatmul.mubr.f32.gmra.mrb[0].mxu0 %v52
  %v127 = vpop.f32.mrb[0].mxu0
  %v128 = vadd.f32 %v45, %v127
  %v129 = vpop.f32.mrb[0].mxu0
  %130 = vdwg.mxu0
  %v131 = vmax.f32 %v123, 0.0
  %133 = vrot.lane.b32.xlu0 %v131, 4
  %v134 = vpop.permute.xlu0 %133
  %vm136 = vcmask 31744
  %v137 = vsel %vm136, 0.0, %v134
  %v138 = vld [vmem:[%s5] sm:$0x1]
  %v140 = vlaneseq
  %v141 = vshrl.u32 %v140, 7
  %v142 = vsub.s32 0, %v141
  %v143 = vrot.slane %v138, %v142
  %v145 = vmul.f32 %v137, %v143
  %147 = vrot.lane.b32.xlu0 %v145, 126
  %v148 = vpop.permute.xlu0 %147
  %150 = vrot.lane.b32.xlu0 %v145, 124
  %v151 = vpop.permute.xlu0 %150
  %v153 = vld [vmem:[%s3] sm:$0xff]
  %v154 = vld [vmem:[%s4] sm:$0xff]
  %156 = vset.pattern.permute.xlu0 0
  %157 = vperm.xlu0 %156, %v154
  %v158 = vpop.permute.xlu0 %157
  %vm160 = vcmask 195584
  %v162 = vsel %vm160, %v153, 0
  %164 = vmatprep.subr.mxu0 0.0
  %165 = vmatpush1.msra.mxu0 %v145
  %166 = vmatprep.subr.mxu0 0.0
  %167 = vmatpush1.msra.mxu0 %v148
  %168 = vmatprep.subr.mxu0 0.0
  %169 = vmatpush1.msra.mxu0 %v151
  %170 = vmatprep.subr.mxu0 0.0
  %171 = vmatpush1.msra.mxu0 0.0
  %172 = vmatprep.subr.mxu0 0.0
  %173 = vmatpush1.msra.mxu0 0.0
  %174 = vmatprep.subr.mxu0 0.0
  %175 = vmatpush1.msra.mxu0 0.0
  %176 = vmatprep.subr.mxu0 0.0
  %177 = vmatpush1.msra.mxu0 0.0
  %178 = vmatprep.subr.mxu0 0.0
  %179 = vmatpush1.msra.mxu0 0.0
  %180 = vmatprep.subr.mxu0 0.0
  %181 = vmatpush1.msra.mxu0 0.0
  %182 = vmatprep.subr.mxu0 0.0
  %183 = vmatpush1.msra.mxu0 0.0
  %184 = vmatprep.subr.mxu0 0.0
  %185 = vmatpush1.msra.mxu0 0.0
  %186 = vmatprep.subr.mxu0 0.0
  %187 = vmatpush1.msra.mxu0 0.0
  %188 = vmatprep.subr.mxu0 0.0
  %189 = vmatpush1.msra.mxu0 0.0
  %190 = vmatprep.subr.mxu0 0.0
  %191 = vmatpush1.msra.mxu0 0.0
  %192 = vmatprep.subr.mxu0 0.0
  %193 = vmatpush1.msra.mxu0 0.0
  %194 = vmatprep.subr.mxu0 0.0
  %195 = vmatpush1.msra.mxu0 0.0
  %196 = vmatprep.subr.mxu0 0.0
  %197 = vmatpush1.msra.mxu0 0.0
  %198 = vmatprep.subr.mxu0 0.0
  %199 = vmatpush1.msra.mxu0 0.0
  %200 = vmatprep.subr.mxu0 0.0
  %201 = vmatpush1.msra.mxu0 0.0
  %202 = vmatprep.subr.mxu0 0.0
  %203 = vmatpush1.msra.mxu0 0.0
  %204 = vmatprep.subr.mxu0 0.0
  %205 = vmatpush1.msra.mxu0 0.0
  %206 = vmatprep.subr.mxu0 0.0
  %207 = vmatpush1.msra.mxu0 0.0
  %208 = vmatprep.subr.mxu0 0.0
  %209 = vmatpush1.msra.mxu0 0.0
  %210 = vmatprep.subr.mxu0 0.0
  %211 = vmatpush1.msra.mxu0 0.0
  %212 = vmatprep.subr.mxu0 0.0
  %213 = vmatpush1.msra.mxu0 0.0
  %214 = vmatprep.subr.mxu0 0.0
  %215 = vmatpush1.msra.mxu0 0.0
  %216 = vmatprep.subr.mxu0 0.0
  %217 = vmatpush1.msra.mxu0 0.0
  %218 = vmatprep.subr.mxu0 0.0
  %219 = vmatpush1.msra.mxu0 0.0
  %220 = vmatprep.subr.mxu0 0.0
  %221 = vmatpush1.msra.mxu0 0.0
  %222 = vmatprep.subr.mxu0 0.0
  %223 = vmatpush1.msra.mxu0 0.0
  %224 = vmatprep.subr.mxu0 0.0
  %225 = vmatpush1.msra.mxu0 0.0
  %226 = vmatprep.subr.mxu0 0.0
  %227 = vmatpush1.msra.mxu0 0.0
  %228 = vmatprep.mubr.f32.mxu0 0.0
  %229 = vmatmul.mubr.f32.gmra.mrb[0].mxu0 %v162
  %v230 = vpop.f32.mrb[0].mxu0
  %v231 = vadd.f32 %v158, %v230
  %v232 = vpop.f32.mrb[0].mxu0
  %233 = vdwg.mxu0
  %v234 = vmax.f32 %v231, 0.0
  %v235 = vadd.f32 %v234, %v128
  %v236 = vmax.f32 %v235, 0.0
  %vm237 = vcmask 1014784
  %238 = vst.msk [vmem:[%s6] sm:$0xff] %vm237, %v236
  // Predicated region
  $region26: #{fwd.1} parent=0 // pred_check
    _
  $region27: #{fwd.1} parent=0 // pred_check_branch
    %240 = sbr.rel (0) target = $region29
  $region28: #{fwd.1} parent=0 // pred_region
    _
  $region29: #{fwd.1} parent=0 // pred_fallthru
    _
  // Predicated region
  $region30: #{fwd.1} parent=0 // pred_check
    _
  $region31: #{fwd.1} parent=0 // pred_check_branch
    %242 = sbr.rel (0) target = $region33
  $region32: #{fwd.1} parent=0 // pred_region
    _
  $region33: #{fwd.1} parent=0 // pred_fallthru
    _

</llo_original>
